<compile_context>
chip_gen: v7x
topology: tpu7x:2x2x1
jax: 0.10.0
libtpu: 0.0.40
codegen_flags: <defaults>
</compile_context>

<pallas_src>
import functools

import numpy as np
import jax
import jax.numpy as jnp
from jax.experimental import pallas as pl
from jax.experimental.pallas import tpu as pltpu


# ------------------------------ helpers ------------------------------------ #

def _round_up(x, m):
    return ((x + m - 1) // m) * m


def _block_vmem_bytes(bb, tq, n_pos, t_pad):
    """Double-buffered VMEM footprint with (8,128) tile padding of every block."""
    tq8 = _round_up(tq, 8)
    qp_blk = bb * tq8 * _round_up(1 + n_pos, 128) * 4    # combined cls+pos input
    tgt_blk = bb * _round_up(max(n_pos, 1), 8) * t_pad * 4  # per-batch target input
    out_blk = bb * tq8 * t_pad * 4                        # cost output block
    return 2 * (qp_blk + tgt_blk + out_blk)


def _choose_tiles(batch, q, n_pos, t_pad, budget_bytes, target_out_bytes=4 << 20):
    """Pick (bb, tq): output block ~2-4 MB, padded working set within budget,
    and >= 2 grid blocks whenever possible (v7x has 2 TensorCores)."""
    def divisors(n):
        return [d for d in range(1, n + 1) if n % d == 0]

    # tq must satisfy the (8,128) BlockSpec rule on the second-to-last dim:
    # divisible by 8 or equal to the full query extent.
    tq_opts = [d for d in divisors(q) if d == q or d % 8 == 0]
    if not tq_opts:
        tq_opts = [q]

    best_key, best = None, (1, min(tq_opts))
    for bb in divisors(batch):
        for tq in tq_opts:
            wb = _block_vmem_bytes(bb, tq, n_pos, t_pad)
            if wb > budget_bytes:
                continue
            out_b = bb * tq * t_pad * 4           # useful (unpadded) store bytes
            n_blocks = (batch // bb) * (q // tq)
            eff = min(out_b, target_out_bytes)
            if n_blocks == 1:                     # a single block idles one v7x core
                eff //= 2
            key = (eff, 1 if n_blocks % 2 == 0 else 0, -wb)
            if best_key is None or key > best_key:
                best_key, best = key, (bb, tq)
    return best


# ----------------------------- Pallas kernel ------------------------------- #

def _cost_kernel(qp_ref, tgt_ref, c_ref, *, n_pos, cost_l1):
    """C[b, q, t] = qp[b, q, 0] + cost_l1 * sum_p |qp[b, q, 1+p] - tgt[b, p, t]|."""
    qp = qp_ref[...].astype(jnp.float32)        # [bb, tq, 1+P]
    tgt = tgt_ref[...].astype(jnp.float32)      # [bb, P, T_pad]
    cls = qp[:, :, 0:1]                         # [bb, tq, 1] (class term, hoisted)

    if n_pos == 0:
        dist = jnp.zeros(c_ref.shape, jnp.float32)
    else:
        dist = jnp.abs(qp[:, :, 1:2] - tgt[:, 0:1, :])      # [bb, tq, T_pad]
        for p in range(1, n_pos):                           # tiny static unroll
            dist = dist + jnp.abs(qp[:, :, p + 1:p + 2] - tgt[:, p:p + 1, :])

    # cost_l1 (incl. its sign) folded into the single final combine.
    c_ref[...] = (cls + cost_l1 * dist).astype(c_ref.dtype)


def compute_block_cost_matrix(qp, tgt, cost_l1):
    """qp: [B, Q, 1+P] (col 0 = class cost, cols 1: = positions).
    tgt: [B, P, T_pad] per-batch targets (transposed, zero-padded).
    Returns C: [B, Q, T_pad]; C[b, :, :size_b] is the valid block."""
    B, Q, F = qp.shape
    P = F - 1
    T_pad = tgt.shape[-1]

    # Working-set budget (double-buffered, (8,128)-padded) that fits every
    # generation's scoped VMEM once the limit below is applied.
    budget = 20 << 20
    bb, tq = _choose_tiles(B, Q, P, T_pad, budget)
    grid = (B // bb, Q // tq)

    wb = _block_vmem_bytes(bb, tq, P, T_pad)
    params = dict(dimension_semantics=("parallel", "parallel"))
    if wb > (10 << 20):
        # v5e default scoped VMEM is 16 MiB; 32 MiB is safe everywhere
        # (v7x physical VMEM is 64 MiB, v5e/v6e 128 MiB).
        params["vmem_limit_bytes"] = 32 << 20

    kernel = functools.partial(_cost_kernel, n_pos=P, cost_l1=float(cost_l1))

    flops = (3 * P + 2) * B * Q * T_pad
    bytes_accessed = 4 * (B * Q * F + B * P * T_pad + B * Q * T_pad)

    # TODO(synk): on v7x only, bf16 accumulation in the p-loop would ~2x VPU
    # throughput; kept f32 for v5e portability and assignment stability.
    return pl.pallas_call(
        kernel,
        out_shape=jax.ShapeDtypeStruct((B, Q, T_pad), jnp.float32),
        grid=grid,
        in_specs=[
            pl.BlockSpec((bb, tq, F), lambda b, q: (b, q, 0)),       # cls+pos
            pl.BlockSpec((bb, P, T_pad), lambda b, q: (b, 0, 0)),    # targets
        ],
        out_specs=pl.BlockSpec((bb, tq, T_pad), lambda b, q: (b, q, 0)),
        compiler_params=pltpu.CompilerParams(**params),
        cost_estimate=pl.CostEstimate(flops=flops, transcendentals=0,
                                      bytes_accessed=bytes_accessed),
    )(qp, tgt)


# ------------------------ host-side Hungarian solver ----------------------- #
# TODO(synk): scipy.optimize.linear_sum_assignment has no Pallas equivalent
# (sequential augmenting-path algorithm); solved on host in NumPy instead.

def _linear_sum_assignment(cost):
    """O(n^3) Hungarian (potentials / Jonker-Volgenant), scipy-compatible output."""
    cost = np.asarray(cost, dtype=np.float64)
    transposed = False
    if cost.shape[0] > cost.shape[1]:
        cost = cost.T
        transposed = True
    n, m = cost.shape
    INF = np.inf
    u = np.zeros(n + 1)
    v = np.zeros(m + 1)
    p = np.zeros(m + 1, dtype=np.int64)
    way = np.zeros(m + 1, dtype=np.int64)
    for i in range(1, n + 1):
        p[0] = i
        j0 = 0
        minv = np.full(m + 1, INF)
        used = np.zeros(m + 1, dtype=bool)
        while True:
            used[j0] = True
            i0 = p[j0]
            delta = INF
            j1 = 0
            for j in range(1, m + 1):
                if not used[j]:
                    cur = cost[i0 - 1, j - 1] - u[i0] - v[j]
                    if cur < minv[j]:
                        minv[j] = cur
                        way[j] = j0
                    if minv[j] < delta:
                        delta = minv[j]
                        j1 = j
            for j in range(m + 1):
                if used[j]:
                    u[p[j]] += delta
                    v[j] -= delta
                else:
                    minv[j] -= delta
            j0 = j1
            if p[j0] == 0:
                break
        while True:
            j1 = way[j0]
            p[j0] = p[j1]
            j0 = j1
            if j0 == 0:
                break
    rows, cols = [], []
    for j in range(1, m + 1):
        if p[j] != 0:
            rows.append(p[j] - 1)
            cols.append(j - 1)
    rows = np.asarray(rows, dtype=np.int64)
    cols = np.asarray(cols, dtype=np.int64)
    if transposed:
        rows, cols = cols, rows
    order = np.argsort(rows)
    return rows[order], cols[order]


# ------------------------------- matcher ----------------------------------- #

class GPUHungarianMatcherPallas:
    """JAX/Pallas port of TFCO GPUHungarianMatcher (forward only, no grads)."""

    def __init__(self, cost_class: float = 1.0, cost_l1: float = 1.0):
        self.cost_class = float(cost_class)
        self.cost_l1 = float(cost_l1)

    def cost_blocks(self, outputs, targets):
        """Kernel-computed per-batch cost blocks: C[b, :, :size_b] is valid."""
        outputs = jnp.asarray(outputs)
        B, Q, F = outputs.shape
        P = F - 1
        sizes = [int(v.shape[0]) for v in targets]
        t_max = max(sizes) if sizes else 0
        T_pad = max(128, _round_up(max(t_max, 1), 128))   # lane-dense output width

        # Class term hoisted out of the kernel; note the original module
        # softmaxes over the *query* axis (outputs[:, :, 0].softmax(-1)).
        logits = outputs[:, :, 0].astype(jnp.float32)
        prob = jax.nn.softmax(logits, axis=-1)                     # [B, Q]
        cls_cost = (self.cost_class * (-prob))[:, :, None]         # [B, Q, 1]

        # Single combined input: column 0 = class cost, columns 1: = positions.
        qp = jnp.concatenate(
            [cls_cost, outputs[:, :, 1:].astype(jnp.float32)], axis=-1)

        # Per-batch targets, transposed to [P, T_pad], zero-padded (padded
        # columns hold garbage-but-finite costs; host must only read [:size]).
        tgt_padded = np.zeros((B, P, T_pad), dtype=np.float32)
        for b, t in enumerate(targets):
            tp = np.asarray(t)[:, 1:].astype(np.float32)           # [size_b, P]
            if tp.shape[0]:
                tgt_padded[b, :, :tp.shape[0]] = tp.T
        tgt = jnp.asarray(tgt_padded)

        C = compute_block_cost_matrix(qp, tgt, self.cost_l1)
        return C, sizes

    def __call__(self, outputs, targets):
        C, sizes = self.cost_blocks(outputs, targets)
        t_max = max(sizes) if sizes else 0
        # Transfer only the useful columns to host (T_pad can be >> t_max).
        C_use = C[:, :, :max(t_max, 1)]
        C_host = np.asarray(jax.device_get(C_use))                 # [B, Q, t_max]

        indices = []
        for b, size in enumerate(sizes):
            c = C_host[b, :, :size]
            row_ind, col_ind = _linear_sum_assignment(c)
            indices.append((jnp.asarray(row_ind), jnp.asarray(col_ind)))
        return indices


# --------------------------------- demo ------------------------------------ #

if __name__ == "__main__":
    key = jax.random.PRNGKey(0)
    B, Q, P = 2, 8, 2                       # batch, num_queries, pos_dim
    k1, k2 = jax.random.split(key)

    outputs = jax.random.normal(k1, (B, Q, 1 + P), dtype=jnp.float32)

    sizes = [4, 4]
    tkeys = jax.random.split(k2, B)
    targets = []
    for i, n in enumerate(sizes):
        lk, pk = jax.random.split(tkeys[i])
        labels = jax.random.randint(lk, (n, 1), 0, 2).astype(jnp.float32)
        pos = jax.random.uniform(pk, (n, P), dtype=jnp.float32)
        targets.append(jnp.concatenate([labels, pos], axis=1))   # [n_i, 1+P]

    matcher = GPUHungarianMatcherPallas(cost_class=1.0, cost_l1=1.0)

    # Run the kernel + matcher.
    C_ker, _ = matcher.cost_blocks(outputs, targets)
    C_ker = np.asarray(jax.block_until_ready(C_ker))
    indices = matcher(outputs, targets)
    for r, c in indices:
        jax.block_until_ready(r)
        jax.block_until_ready(c)

    # NumPy reference (full matrix, matching the PyTorch module) and check the
    # kernel's block-diagonal slices against the reference block-diagonal.
    o = np.asarray(outputs, dtype=np.float32)
    logits = o[:, :, 0]
    prob = np.exp(logits - logits.max(-1, keepdims=True))
    prob = prob / prob.sum(-1, keepdims=True)
    pos_np = o[:, :, 1:]
    tgt_np = np.concatenate([np.asarray(t)[:, 1:] for t in targets], axis=0)
    dist = np.abs(pos_np[:, :, None, :] - tgt_np[None, None, :, :]).sum(-1)
    C_ref_full = -prob[:, :, None] + dist                     # [B, Q, T_total]

    offset = 0
    for b, size in enumerate(sizes):
        ref_blk = C_ref_full[b, :, offset:offset + size]
        ker_blk = C_ker[b, :, :size]
        assert np.allclose(ker_blk, ref_blk, rtol=1e-5, atol=1e-5), \
            f"cost block mismatch at batch {b}"
        # also check the assignment matches the reference solve
        r_ref, c_ref = _linear_sum_assignment(ref_blk)
        r_got, c_got = indices[b]
        assert np.array_equal(np.asarray(r_got), r_ref)
        assert np.array_equal(np.asarray(c_got), c_ref)
        offset += size

    print("KERNEL_OK")
</pallas_src>

<mosaic_0001>
module attributes {stable_mosaic.version = 11 : i64} {
  func.func @_cost_kernel(%arg0: i32, %arg1: i32, %arg2: memref<1x8x3xf32, #tpu.memory_space<vmem>>, %arg3: memref<1x2x128xf32, #tpu.memory_space<vmem>>, %arg4: memref<1x8x128xf32, #tpu.memory_space<vmem>>) attributes {dimension_semantics = [#tpu.dimension_semantics<parallel>, #tpu.dimension_semantics<parallel>], iteration_bounds = array<i64: 2, 1>, scalar_prefetch = 0 : i64, scratch_operands = 0 : i64, tpu.core_type = #tpu.core_type<tc>, window_params = [{transform_indices = @transform_0, window_bounds = array<i64: 1, 8, 3>}, {transform_indices = @transform_1, window_bounds = array<i64: 1, 2, 128>}, {transform_indices = @transform_2, window_bounds = array<i64: 1, 8, 128>}]} {
    %c0 = arith.constant 0 : index
    %c0_0 = arith.constant 0 : index
    %c0_1 = arith.constant 0 : index
    %0 = vector.load %arg2[%c0, %c0_0, %c0_1] : memref<1x8x3xf32, #tpu.memory_space<vmem>>, vector<1x8x3xf32>
    %c0_2 = arith.constant 0 : index
    %c0_3 = arith.constant 0 : index
    %c0_4 = arith.constant 0 : index
    %1 = vector.load %arg3[%c0_2, %c0_3, %c0_4] : memref<1x2x128xf32, #tpu.memory_space<vmem>>, vector<1x2x128xf32>
    %2 = vector.extract_strided_slice %0 {offsets = [0, 0, 0], sizes = [1, 8, 1], strides = [1, 1, 1]} : vector<1x8x3xf32> to vector<1x8x1xf32>
    %3 = vector.extract_strided_slice %0 {offsets = [0, 0, 1], sizes = [1, 8, 1], strides = [1, 1, 1]} : vector<1x8x3xf32> to vector<1x8x1xf32>
    %4 = vector.extract_strided_slice %1 {offsets = [0, 0, 0], sizes = [1, 1, 128], strides = [1, 1, 1]} : vector<1x2x128xf32> to vector<1x1x128xf32>
    %5 = vector.broadcast %3 : vector<1x8x1xf32> to vector<1x8x128xf32>
    %6 = vector.broadcast %4 : vector<1x1x128xf32> to vector<1x8x128xf32>
    %7 = arith.subf %5, %6 : vector<1x8x128xf32>
    %8 = math.absf %7 : vector<1x8x128xf32>
    %9 = vector.extract_strided_slice %0 {offsets = [0, 0, 2], sizes = [1, 8, 1], strides = [1, 1, 1]} : vector<1x8x3xf32> to vector<1x8x1xf32>
    %10 = vector.extract_strided_slice %1 {offsets = [0, 1, 0], sizes = [1, 1, 128], strides = [1, 1, 1]} : vector<1x2x128xf32> to vector<1x1x128xf32>
    %11 = vector.broadcast %9 : vector<1x8x1xf32> to vector<1x8x128xf32>
    %12 = vector.broadcast %10 : vector<1x1x128xf32> to vector<1x8x128xf32>
    %13 = arith.subf %11, %12 : vector<1x8x128xf32>
    %14 = math.absf %13 : vector<1x8x128xf32>
    %15 = arith.addf %8, %14 : vector<1x8x128xf32>
    %cst = arith.constant 1.000000e+00 : f32
    %16 = vector.broadcast %cst : f32 to vector<1x8x128xf32>
    %17 = arith.mulf %16, %15 : vector<1x8x128xf32>
    %18 = vector.broadcast %2 : vector<1x8x1xf32> to vector<1x8x128xf32>
    %19 = arith.addf %18, %17 : vector<1x8x128xf32>
    %c0_5 = arith.constant 0 : index
    %c0_6 = arith.constant 0 : index
    %c0_7 = arith.constant 0 : index
    %20 = vector.load %arg4[%c0_5, %c0_6, %c0_7] : memref<1x8x128xf32, #tpu.memory_space<vmem>>, vector<1x8x128xf32>
    tpu.vector_store %arg4[%c0_5, %c0_6, %c0_7], %19 {strides = array<i32>} : memref<1x8x128xf32, #tpu.memory_space<vmem>>, vector<1x8x128xf32>,
    return
  }
  func.func @transform_0(%arg0: i32, %arg1: i32) -> (i32, i32, i32) {
    %c0_i32 = arith.constant 0 : i32
    %c0_i32_0 = arith.constant 0 : i32
    return %arg0, %arg1, %c0_i32 : i32, i32, i32
  }
  func.func @transform_1(%arg0: i32, %arg1: i32) -> (i32, i32, i32) {
    %c0_i32 = arith.constant 0 : i32
    %c0_i32_0 = arith.constant 0 : i32
    %c0_i32_1 = arith.constant 0 : i32
    return %arg0, %c0_i32, %c0_i32_0 : i32, i32, i32
  }
  func.func @transform_2(%arg0: i32, %arg1: i32) -> (i32, i32, i32) {
    %c0_i32 = arith.constant 0 : i32
    %c0_i32_0 = arith.constant 0 : i32
    return %arg0, %arg1, %c0_i32 : i32, i32, i32
  }
}

</mosaic_0001>

<llo_original>
// kernel: tpu_custom_call.1
$region0: #{tpu_custom_call.1}
  #allocation0 [shape = 'u32[]', space=smem, size = 0x4, offset = 0x4, fixed_abs, tag = 'smem constant byte address 0x4 - core index']
  #allocation1 [shape = 'u32[144,128]{1,0:T(1,128)}', space=vmem, size = 0x12000, scoped, tag = 'internal scratch']
  %s0 = inlined_call_operand.vmem [shape: f32[2,8,3], index: 0, kind: input, shape index: {}]
  %s1 = inlined_call_operand.vmem [shape: f32[2,2,128], index: 1, kind: input, shape index: {}]
  %s2 = inlined_call_operand.hbm [shape: f32[2,8,128], index: 2, kind: output, shape index: {}]
  %s3 = sld [smem:[#allocation0]]
  $region41: #{tpu_custom_call.1} parent=0
    _
  %s5 = ssub.s32 1, %s3
  %s6 = scalar_select 0, %s5, %s3
  $region1: #{tpu_custom_call.1} parent=0
    #allocation2 [shape = 'u8[8192]{0}', space=vmem, size = 0x2000, scoped, tag = 'output window, operand 0']
    #allocation3 [shape = 's32[2]{0}', space=sflag, size = 0x8, scoped, tag = 'scoped memory for tpu_custom_call.1']
    %7 = vsyncpa [#allocation3], 0
    %s8 = scalar_lea.sflag [#allocation3], 1
    %9 = vsyncpa %s8, 0
    loop: start=0, step=1, limit=4
    $region2: #{tpu_custom_call.1} parent=1 // loop_pre_header
      _
    $region3: #{tpu_custom_call.1} parent=1 // loop_header
      %s11 = sphi 0, %s15
      %p12 = scmp.ge.s32.totalorder %s11, 4
      %s18 = sphi 0, %s30
      %s19 = sphi 0, %s26
      %s20 = sphi 0, %s18
      %s21 = sphi 0, %s19
      %s22 = sphi 0, %s20
      %s23 = sphi 0, %s21
      %s35 = sphi 0, %s37
      %s38 = sphi 0, %s35
      %s39 = sphi 0, %s38
      %s55 = sphi 0, %s39
      %s61 = sphi 0, %s63
      %s64 = sphi 0, %s61
      %s65 = sphi 0, %s64
      %s81 = sphi 0, %s65
      %s89 = sphi 0, %s91
      %s92 = sphi 0, %s89
      %s93 = sphi 0, %s92
      %s109 = sphi 0, %s93
    $region4: #{tpu_custom_call.1} parent=1 // loop_header_branch
      %14 = sbr.rel (%p12) target = $region8
    $region5: #{tpu_custom_call.1} parent=1 // loop_body
      %s16 = ssub.s32 %s11, 1
      %s17 = ssub.s32 %s11, 2
      %s24 = sadd.s32 1, %s19
      %p25 = scmp.ge.s32.totalorder %s24, 1
      %s26 = scalar_select %p25, 0, %s24
      %s27 = sadd.s32 1, %s18
      %s28 = scalar_select %p25, %s27, %s18
      %p29 = scmp.ge.s32.totalorder %s28, 2
      %s30 = scalar_select %p29, 0, %s28
      %s31 = ssub.s32 %s18, %s30
      %s32 = ssub.s32 %s19, %s26
      %s33 = sor.u32 %s31, %s32
      %p34 = scmp.eq.s32.totalorder %s33, 0
      %s36 = sadd.s32 %s35, 1
      %s37 = scalar_select %p34, %s35, %s36
      %p40 = pneg %p34
      %p41 = scmp.eq.s32.totalorder %s11, 1
      %p42 = por %p40, %p41
      %p43 = scmp.ne.s32.totalorder %s35, %s38
      %p44 = scmp.eq.s32.totalorder %s11, 0
      %p45 = por %p43, %p44
      %p46 = scmp.ne.s32.totalorder %s35, %s38
      %p47 = scmp.eq.s32.totalorder %s16, 1
      %p48 = por %p46, %p47
      %p49 = scmp.ne.s32.totalorder %s38, %s39
      %p50 = scmp.eq.s32.totalorder %s16, 0
      %p51 = por %p49, %p50
      %p52 = scmp.ne.s32.totalorder %s38, %s39
      %p53 = scmp.eq.s32.totalorder %s17, 1
      %p54 = por %p52, %p53
      %p56 = scmp.ne.s32.totalorder %s39, %s55
      %p57 = scmp.eq.s32.totalorder %s17, 0
      %p58 = por %p56, %p57
      %s59 = ssub.s32 %s18, %s30
      %p60 = scmp.eq.s32.totalorder %s59, 0
      %s62 = sadd.s32 %s61, 1
      %s63 = scalar_select %p60, %s61, %s62
      %p66 = pneg %p60
      %p67 = scmp.eq.s32.totalorder %s11, 1
      %p68 = por %p66, %p67
      %p69 = scmp.ne.s32.totalorder %s61, %s64
      %p70 = scmp.eq.s32.totalorder %s11, 0
      %p71 = por %p69, %p70
      %p72 = scmp.ne.s32.totalorder %s61, %s64
      %p73 = scmp.eq.s32.totalorder %s16, 1
      %p74 = por %p72, %p73
      %p75 = scmp.ne.s32.totalorder %s64, %s65
      %p76 = scmp.eq.s32.totalorder %s16, 0
      %p77 = por %p75, %p76
      %p78 = scmp.ne.s32.totalorder %s64, %s65
      %p79 = scmp.eq.s32.totalorder %s17, 1
      %p80 = por %p78, %p79
      %p82 = scmp.ne.s32.totalorder %s65, %s81
      %p83 = scmp.eq.s32.totalorder %s17, 0
      %p84 = por %p82, %p83
      %s85 = ssub.s32 %s18, %s30
      %s86 = ssub.s32 %s19, %s26
      %s87 = sor.u32 %s85, %s86
      %p88 = scmp.eq.s32.totalorder %s87, 0
      %s90 = sadd.s32 %s89, 1
      %s91 = scalar_select %p88, %s89, %s90
      %p94 = pneg %p88
      %p95 = scmp.eq.s32.totalorder %s11, 1
      %p96 = por %p94, %p95
      %p97 = scmp.ne.s32.totalorder %s89, %s92
      %p98 = scmp.eq.s32.totalorder %s11, 0
      %p99 = por %p97, %p98
      %p100 = scmp.ne.s32.totalorder %s89, %s92
      %p101 = scmp.eq.s32.totalorder %s16, 1
      %p102 = por %p100, %p101
      %p103 = scmp.ne.s32.totalorder %s92, %s93
      %p104 = scmp.eq.s32.totalorder %s16, 0
      %p105 = por %p103, %p104
      %p106 = scmp.ne.s32.totalorder %s92, %s93
      %p107 = scmp.eq.s32.totalorder %s17, 1
      %p108 = por %p106, %p107
      %p110 = scmp.ne.s32.totalorder %s93, %s109
      %p111 = scmp.eq.s32.totalorder %s17, 0
      %p112 = por %p110, %p111
      %p113 = scmp.le.s32.totalorder 1, %s11
      %p114 = scmp.lt.s32.totalorder %s11, 3
      %p115 = pnand %p113, %p114
      %p116 = pneg %p115
      // Predicated region
      $region9: #{tpu_custom_call.1} parent=5 // pred_check
        _
      $region10: #{tpu_custom_call.1} parent=5 // pred_check_branch
        %118 = sbr.rel (%p115) target = $region12
      $region11: #{tpu_custom_call.1} parent=5 // pred_region
        %s119 = ssub.s32 %s11, 1
      $region12: #{tpu_custom_call.1} parent=5 // pred_fallthru
        _
      %p120 = scmp.lt.s32.totalorder %s11, 2
      // Predicated region
      $region13: #{tpu_custom_call.1} parent=5 // pred_check
        %p121 = pneg %p120
      $region14: #{tpu_custom_call.1} parent=5 // pred_check_branch
        %123 = sbr.rel (%p121) target = $region16
      $region15: #{tpu_custom_call.1} parent=5 // pred_region
        // Predicated region
        $region17: #{tpu_custom_call.1} parent=15 // pred_check
          %p124 = pneg %p45
        $region18: #{tpu_custom_call.1} parent=15 // pred_check_branch
          %126 = sbr.rel (%p124) target = $region20
        $region19: #{tpu_custom_call.1} parent=15 // pred_region
          %p127 = scmp.lt.s32.totalorder %s18, 1
          %s128 = scalar_select %p127, %s18, 1
          %p129 = scmp.lt.s32.totalorder %s19, 0
          %s130 = scalar_select %p129, %s19, 0
          %s131 = sadd.s32 %s130, %s128
          %s132 = smul.addr %s131, 8
          %s133 = scalar_lea.vmem %s0, %s132
        $region20: #{tpu_custom_call.1} parent=15 // pred_fallthru
          _
        // Predicated region
        $region21: #{tpu_custom_call.1} parent=15 // pred_check
          %p134 = pneg %p71
        $region22: #{tpu_custom_call.1} parent=15 // pred_check_branch
          %136 = sbr.rel (%p134) target = $region24
        $region23: #{tpu_custom_call.1} parent=15 // pred_region
          %p137 = scmp.lt.s32.totalorder %s18, 1
          %s138 = scalar_select %p137, %s18, 1
          %s139 = smul.addr %s138, 2
          %s140 = scalar_lea.vmem %s1, %s139
        $region24: #{tpu_custom_call.1} parent=15 // pred_fallthru
          _
      $region16: #{tpu_custom_call.1} parent=5 // pred_fallthru
        _
      %p141 = scmp.le.s32.totalorder 1, %s11
      %p142 = scmp.lt.s32.totalorder %s11, 3
      %p143 = pnand %p141, %p142
      %p144 = pneg %p143
      // Predicated region
      $region25: #{tpu_custom_call.1} parent=5 // pred_check
        _
      $region26: #{tpu_custom_call.1} parent=5 // pred_check_branch
        %146 = sbr.rel (%p143) target = $region28
      $region27: #{tpu_custom_call.1} parent=5 // pred_region
        %s147 = ssub.s32 %s11, 1
        %p148 = scmp.lt.s32.totalorder %s20, 1
        %s149 = scalar_select %p148, %s20, 1
        %p150 = scmp.lt.s32.totalorder %s21, 0
        %s151 = scalar_select %p150, %s21, 0
        %s152 = sadd.s32 %s151, %s149
        %s153 = smul.addr %s152, 8
        %s154 = scalar_lea.vmem %s0, %s153
        %p155 = pneg %p51
        %p156 = pneg %p48
        %p157 = scmp.lt.s32.totalorder %s20, 1
        %s158 = scalar_select %p157, %s20, 1
        %s159 = smul.addr %s158, 2
        %s160 = scalar_lea.vmem %s1, %s159
        %p161 = pneg %p77
        %p162 = pneg %p74
        %p163 = pneg %p105
        %p164 = pneg %p102
        %s165 = sand.u32 %s92, 1
        %s166 = scalar_lea.sflag [#allocation3], %s165
        %s167 = sand.u32 %s92, 1
        %s168 = smul.addr %s167, 8
        %s169 = scalar_lea.vmem [#allocation2], %s168
        %p170 = scmp.lt.s32.totalorder %s20, 1
        %s171 = scalar_select %p170, %s20, 1
        %p172 = scmp.lt.s32.totalorder %s21, 0
        %s173 = scalar_select %p172, %s21, 0
        %s174 = sadd.s32 %s173, %s171
        %s175 = smul.addr %s174, 8
        %s176 = scalar_lea.vmem %s0, %s175
        %p177 = scmp.lt.s32.totalorder %s20, 1
        %s178 = scalar_select %p177, %s20, 1
        %s179 = smul.addr %s178, 2
        %s180 = scalar_lea.vmem %s1, %s179
        %v181 = vld [vmem:[%s176] sm:$0xff]
        %v182 = vld [vmem:[%s180] sm:$0x3]
        %184 = vset.pattern.permute.xlu0 1
        %185 = vperm.xlu0 %184, %v181
        %v186 = vpop.permute.xlu0 %185
        %v188 = vlaneseq
        %v189 = vshrl.u32 %v188, 7
        %v190 = vsub.s32 0, %v189
        %v191 = vrot.slane %v182, %v190
        %v192 = vsub.f32 %v186, %v191
        %v193 = vand.u32 2147483647, %v192
        %194 = vset.pattern.permute.xlu0 2
        %195 = vperm.xlu0 %194, %v181
        %v196 = vpop.permute.xlu0 %195
        %v198 = vlaneseq
        %v199 = vshrl.u32 %v198, 7
        %v200 = vsub.s32 1, %v199
        %v201 = vrot.slane %v182, %v200
        %v202 = vsub.f32 %v196, %v201
        %v203 = vand.u32 2147483647, %v202
        %v204 = vadd.f32 %v193, %v203
        %205 = vset.pattern.permute.xlu0 0
        %206 = vperm.xlu0 %205, %v181
        %v207 = vpop.permute.xlu0 %206
        %v209 = vadd.f32 %v207, %v204
        %210 = vst [vmem:[%s169] sm:$0xff] %v209
        %s211 = sand.u32 %s92, 1
        %s212 = scalar_lea.sflag [#allocation3], %s211
        %s213 = sand.u32 %s92, 1
        %s214 = smul.addr %s213, 8
        %s215 = scalar_lea.vmem [#allocation2], %s214
        // Predicated region
        $region29: #{tpu_custom_call.1} parent=27 // pred_check
          %p216 = pneg %p102
        $region30: #{tpu_custom_call.1} parent=27 // pred_check_branch
          %218 = sbr.rel (%p216) target = $region32
        $region31: #{tpu_custom_call.1} parent=27 // pred_region
          %s220 = ssub.s32 128, 128
          %221 = vsyncadd %s212, %s220
          %s222 = sadd.s32 %s21, %s20
          %s223 = smul.addr %s222, 128
          %s224 = scalar_lea.hbm %s2, %s223
          %s226 = sshll.u32 %s215, 4
          %s227 = int_to_ptr.vmem [resolvable:$true] %s226
          %229 = dma.vmem_to_hbm [thread:$0]  %s227, 128, %s224, %s212
        $region32: #{tpu_custom_call.1} parent=27 // pred_fallthru
          _
      $region28: #{tpu_custom_call.1} parent=5 // pred_fallthru
        _
      %p230 = scmp.le.s32.totalorder 2, %s11
      // Predicated region
      $region33: #{tpu_custom_call.1} parent=5 // pred_check
        %p231 = pneg %p230
      $region34: #{tpu_custom_call.1} parent=5 // pred_check_branch
        %233 = sbr.rel (%p231) target = $region36
      $region35: #{tpu_custom_call.1} parent=5 // pred_region
        %s234 = ssub.s32 %s11, 2
        // Predicated region
        $region37: #{tpu_custom_call.1} parent=35 // pred_check
          %p235 = pneg %p108
        $region38: #{tpu_custom_call.1} parent=35 // pred_check_branch
          %237 = sbr.rel (%p235) target = $region40
        $region39: #{tpu_custom_call.1} parent=35 // pred_region
          %s238 = sand.u32 %s93, 1
          %s239 = scalar_lea.sflag [#allocation3], %s238
          %s240 = sand.u32 %s93, 1
          %s241 = smul.addr %s240, 8
          %s242 = scalar_lea.vmem [#allocation2], %s241
          %243 = dma.done %s239, 128
        $region40: #{tpu_custom_call.1} parent=35 // pred_fallthru
          _
      $region36: #{tpu_custom_call.1} parent=5 // pred_fallthru
        _
    $region6: #{tpu_custom_call.1} parent=1 // loop_footer
      %s15 = sadd.s32 1, %s11
    $region7: #{tpu_custom_call.1} parent=1 // loop_footer_branch
      %10 = sbr.rel target = $region3
    $region8: #{tpu_custom_call.1} parent=1 // loop_exit
      _
    %244 = vsyncpa [#allocation3], 1
    %s245 = scalar_lea.sflag [#allocation3], 1
    %246 = vsyncpa %s245, 1

</llo_original>
